<compile_context>
chip_gen: v7x
topology: tpu7x:2x2x1
jax: 0.10.0
libtpu: 0.0.40
codegen_flags: <defaults>
</compile_context>

<pallas_src>
import functools

import numpy as np

import jax
import jax.numpy as jnp
from jax.experimental import pallas as pl
from jax.experimental.pallas import tpu as pltpu


def _round_up(n: int, m: int) -> int:
    return (n + m - 1) // m * m


# ----------------------------------------------------------------------------
# Kernels
# ----------------------------------------------------------------------------
def _resident_kernel(x_ref, w_ref, b_ref, o_ref, *, residual, matmul_dtype):
    """Whole weight VMEM-resident: fused matmul + bias + optional residual."""
    x = x_ref[...]                                             # (TB, Din)
    y = jnp.dot(x.astype(matmul_dtype), w_ref[...].astype(matmul_dtype),
                preferred_element_type=jnp.float32)            # (TB, Dout) f32
    y = y + b_ref[...].astype(jnp.float32)                     # (1, Dout) broadcast
    if residual:                                               # static Python flag
        y = y + x.astype(jnp.float32)
    o_ref[...] = y.astype(o_ref.dtype)


def _tiled_kernel(x_ref, w_ref, b_ref, o_ref, acc_ref, *, residual, matmul_dtype):
    """K/N-tiled path for large weights. Grid = (batch, N, K), K last."""
    k = pl.program_id(2)

    @pl.when(k == 0)
    def _init():                                               # acc <- bias
        acc_ref[...] = jnp.broadcast_to(
            b_ref[...].astype(jnp.float32), acc_ref.shape)

    x = x_ref[...]                                             # (TB, TK)
    acc_ref[...] += jnp.dot(x.astype(matmul_dtype), w_ref[...].astype(matmul_dtype),
                            preferred_element_type=jnp.float32)

    if residual:
        # Din == Dout and TK == TN: the residual slice for output columns
        # [j*TN, (j+1)*TN) is exactly the x K-block at k == j.
        @pl.when(k == pl.program_id(1))
        def _residual():
            acc_ref[...] += x.astype(jnp.float32)

    @pl.when(k == pl.num_programs(2) - 1)
    def _finalize():
        o_ref[...] = acc_ref[...].astype(o_ref.dtype)


# ----------------------------------------------------------------------------
# VMEM budgeting / tile selection
# ----------------------------------------------------------------------------
def _vmem_budget_bytes() -> int:
    """Per-generation scoped-VMEM budget: <= 3/4 of physical, capped at 96 MiB
    (v7x: 64 MiB physical -> 48 MiB; v5e/v6e: 128 MiB -> 96 MiB)."""
    cap = 64 * 1024 * 1024                       # conservative (v7x) fallback
    try:
        cap = int(getattr(pltpu.get_tpu_info(), "vmem_capacity_bytes", cap)) or cap
    except Exception:
        pass
    return max(16 * 1024 * 1024, min(96 * 1024 * 1024, (cap * 3) // 4))


def _pick_batch_tile(batch, bytes_per_row, resident_bytes, vmem_budget, block_batch):
    """Batch tile: multiple of 8, fits the VMEM budget, and (when the batch is
    splittable) gives >= 2 grid steps so both v7x TensorCores get work."""
    block_batch = max(8, _round_up(int(block_batch), 8))
    avail = vmem_budget - resident_bytes
    cap = (avail // max(bytes_per_row, 1)) // 8 * 8 if avail > 0 else 0
    cap = max(8, cap)
    target = _round_up(pl.cdiv(batch, 2), 8) if batch > 8 else 8
    return max(8, min(block_batch, cap, target, _round_up(batch, 8)))


def _pick_feature_tile(dim, requested):
    if requested is not None:
        assert requested % 128 == 0 and dim % requested == 0, (dim, requested)
        return int(requested)
    for t in (512, 256, 128):
        if dim % t == 0:
            return t
    return dim          # not 128-aligned (only reachable from the resident path)


# ----------------------------------------------------------------------------
# Parameter preparation (one-time; hoisted out of the per-step forward)
# ----------------------------------------------------------------------------
def prepare_params(w, b=None, *, param_dtype=jnp.float32):
    """Prep parameters once and reuse across forwards.

    w: (Din, Dout)  (= torch.nn.Linear.weight.T).  Optionally cast to bf16 to
       halve weight DMA bytes (MXU accumulation stays f32 in the kernel).
    b: (Dout,) or None.  Kept f32 and reshaped to a (1, Dout) row.
    """
    w = jnp.asarray(w).astype(param_dtype)
    dout = w.shape[1]
    if b is None:
        b_row = jnp.zeros((1, dout), jnp.float32)
    else:
        b_row = jnp.asarray(b, jnp.float32).reshape(1, dout)
    return w, b_row


# ----------------------------------------------------------------------------
# Forward wrapper
# ----------------------------------------------------------------------------
_SINGLE_BUFFER_RESIDENT_OK = True     # flipped off if this JAX rejects pipeline_mode


def _resident_param_spec(shape, single_buffer):
    # Constant index_map -> the block never changes; a single pipeline buffer
    # halves its VMEM footprint (review: pl.Buffered(1) on weight / bias).
    if single_buffer:
        return pl.BlockSpec(shape, lambda i: (0, 0), pipeline_mode=pl.Buffered(1))
    return pl.BlockSpec(shape, lambda i: (0, 0))


def linear_residual(x, w, b=None, *, block_batch=1024, tile_k=None, tile_n=None,
                    force_tiled=False, out_dtype=None):
    """LinearResidualLayer.forward: x @ w + b (+ x when Din == Dout).

    x: (B, Din) f32 or bf16
    w: (Din, Dout) f32 or bf16 (see prepare_params)
    b: None, (Dout,), or a prepared (1, Dout) f32 row
    """
    global _SINGLE_BUFFER_RESIDENT_OK

    B, Din = x.shape
    Dw, Dout = w.shape
    assert Dw == Din, "weight must be (Din, Dout) = torch weight transposed"
    residual = Din == Dout
    out_dtype = x.dtype if out_dtype is None else out_dtype

    b_row = (jnp.zeros((1, Dout), jnp.float32) if b is None
             else jnp.asarray(b, jnp.float32).reshape(1, Dout))

    matmul_dtype = (jnp.bfloat16
                    if (w.dtype == jnp.bfloat16 or x.dtype == jnp.bfloat16)
                    else jnp.float32)

    x_item = jnp.dtype(x.dtype).itemsize
    w_item = jnp.dtype(w.dtype).itemsize
    o_item = jnp.dtype(out_dtype).itemsize
    w_bytes = Din * Dout * w_item
    b_bytes = Dout * 4
    budget = _vmem_budget_bytes()
    flops = 2 * B * Din * Dout

    # Does the (conservatively double-buffer-budgeted) weight plus minimal
    # activation tiles fit the scoped VMEM budget?
    min_tiles = 2 * 8 * (Din * x_item + Dout * o_item)
    resident_fits = 2 * (w_bytes + b_bytes) + min_tiles <= budget
    can_tile = (Din % 128 == 0) and (Dout % 128 == 0)
    use_tiled = can_tile and (force_tiled or not resident_fits)
    # TODO(synk): weights that are both too large for VMEM residency and not
    # 128-aligned on Din/Dout fall back to the resident path and rely on the
    # raised vmem limit; add a padded K/N tiling if such shapes appear.

    if not use_tiled:
        # ---- Path A: whole weight VMEM-resident, batch-only grid -----------
        per_row = 2 * (Din * x_item + Dout * o_item)       # double-buffered x/out
        TB = _pick_batch_tile(B, per_row, 2 * (w_bytes + b_bytes), budget, block_batch)
        grid = (pl.cdiv(B, TB),)
        kernel = functools.partial(_resident_kernel, residual=residual,
                                   matmul_dtype=matmul_dtype)
        cost = pl.CostEstimate(
            flops=flops, transcendentals=0,
            bytes_accessed=B * Din * x_item + w_bytes + b_bytes + B * Dout * o_item)

        def call(single_buffer):
            return pl.pallas_call(
                kernel,
                out_shape=jax.ShapeDtypeStruct((B, Dout), out_dtype),
                grid=grid,
                in_specs=[
                    pl.BlockSpec((TB, Din), lambda i: (i, 0)),         # pipelined x
                    _resident_param_spec((Din, Dout), single_buffer),  # weight
                    _resident_param_spec((1, Dout), single_buffer),    # bias
                ],
                out_specs=pl.BlockSpec((TB, Dout), lambda i: (i, 0)),
                compiler_params=pltpu.CompilerParams(
                    dimension_semantics=("parallel",),
                    vmem_limit_bytes=budget),
                cost_estimate=cost,
            )(x, w, b_row)

        if _SINGLE_BUFFER_RESIDENT_OK:
            try:
                return call(True)
            except Exception:
                # pipeline_mode=pl.Buffered(1) unsupported on this JAX build:
                # fall back to default double buffering (correctness identical).
                _SINGLE_BUFFER_RESIDENT_OK = False
        return call(False)

    # ---- Path B: K/N-tiled grid (batch, N, K) for large weights ------------
    TK = _pick_feature_tile(Din, tile_k)
    TN = _pick_feature_tile(Dout, tile_n)
    if residual:
        TK = TN = min(TK, TN)        # residual folded in at k == j needs TK == TN
    per_row = 2 * (TK * x_item + TN * o_item) + TN * 4      # x/out pipeline + acc
    fixed = 2 * (TK * TN * w_item + TN * 4)                 # w / bias tiles (2 bufs)
    TB = _pick_batch_tile(B, per_row, fixed, budget, block_batch)
    grid = (pl.cdiv(B, TB), Dout // TN, Din // TK)
    kernel = functools.partial(_tiled_kernel, residual=residual,
                               matmul_dtype=matmul_dtype)
    cost = pl.CostEstimate(
        flops=flops, transcendentals=0,
        bytes_accessed=(Dout // TN) * B * Din * x_item + w_bytes
        + b_bytes + B * Dout * o_item)

    return pl.pallas_call(
        kernel,
        out_shape=jax.ShapeDtypeStruct((B, Dout), out_dtype),
        grid=grid,
        in_specs=[
            pl.BlockSpec((TB, TK), lambda i, j, k: (i, k)),
            pl.BlockSpec((TK, TN), lambda i, j, k: (k, j)),
            pl.BlockSpec((1, TN), lambda i, j, k: (0, j)),
        ],
        out_specs=pl.BlockSpec((TB, TN), lambda i, j, k: (i, j)),
        scratch_shapes=[pltpu.VMEM((TB, TN), jnp.float32)],
        compiler_params=pltpu.CompilerParams(
            dimension_semantics=("parallel", "parallel", "arbitrary"),
            vmem_limit_bytes=budget),
        cost_estimate=cost,
    )(x, w, b_row)


# ----------------------------------------------------------------------------
# Self-test
# ----------------------------------------------------------------------------
def _np_reference(x, w, b):
    xn = np.asarray(jnp.asarray(x, jnp.float32), np.float64)
    wn = np.asarray(jnp.asarray(w, jnp.float32), np.float64)
    bn = np.asarray(jnp.asarray(b, jnp.float32), np.float64).reshape(-1)
    y = xn @ wn + bn
    if xn.shape[1] == wn.shape[1]:
        y = y + xn                      # residual path
    return y


def _torch_linear_init(key, din, dout):
    # torch.nn.Linear default init: U(-1/sqrt(fan_in), +1/sqrt(fan_in)).
    kw, kb = jax.random.split(key)
    bound = 1.0 / (din ** 0.5)
    w = jax.random.uniform(kw, (din, dout), jnp.float32, -bound, bound)  # = W_pt.T
    b = jax.random.uniform(kb, (dout,), jnp.float32, -bound, bound)
    return w, b


if __name__ == "__main__":
    key = jax.random.PRNGKey(0)

    def check(name, out, ref, atol, rtol):
        out_np = np.asarray(jnp.asarray(out, jnp.float32), np.float64)
        assert out_np.shape == ref.shape, (name, out_np.shape, ref.shape)
        err = np.abs(out_np - ref).max()
        assert np.allclose(out_np, ref, atol=atol, rtol=rtol), f"{name}: max err {err}"

    # 1) residual path (Din == Dout), resident weight, f32.
    key, kx, kp = jax.random.split(key, 3)
    x = jax.random.normal(kx, (8, 64), jnp.float32)
    w, b = _torch_linear_init(kp, 64, 64)
    wp, bp = prepare_params(w, b)
    out = jax.block_until_ready(linear_residual(x, wp, bp))
    check("residual", out, _np_reference(x, wp, bp), 1e-3, 1e-3)

    # 2) projection (Din != Dout, no residual), bias-free.
    key, kx, kp = jax.random.split(key, 3)
    x = jax.random.normal(kx, (8, 32), jnp.float32)
    w, _ = _torch_linear_init(kp, 32, 48)
    wp, bp = prepare_params(w, None)
    out = jax.block_until_ready(linear_residual(x, wp, bp))
    check("projection", out, _np_reference(x, wp, bp), 1e-3, 1e-3)

    # 3) batch grid with a partial last tile (B=300 -> 2 "parallel" steps).
    key, kx, kp = jax.random.split(key, 3)
    x = jax.random.normal(kx, (300, 64), jnp.float32)
    w, b = _torch_linear_init(kp, 64, 64)
    wp, bp = prepare_params(w, b)
    out = jax.block_until_ready(linear_residual(x, wp, bp))
    check("batched", out, _np_reference(x, wp, bp), 1e-3, 1e-3)

    # 4) bf16 weights + bf16 activations (halved DMA bytes), f32 accumulation.
    key, kx, kp = jax.random.split(key, 3)
    x = jax.random.normal(kx, (64, 128), jnp.float32)
    w, b = _torch_linear_init(kp, 128, 96)
    wp, bp = prepare_params(w, b, param_dtype=jnp.bfloat16)
    x_bf = x.astype(jnp.bfloat16)
    out = jax.block_until_ready(linear_residual(x_bf, wp, bp))
    check("bf16", out, _np_reference(x_bf, wp, bp), 2e-2, 2e-2)

    # 5) K/N-tiled path (forced) with residual folded in at k == j.
    key, kx, kp = jax.random.split(key, 3)
    x = jax.random.normal(kx, (72, 256), jnp.float32)
    w, b = _torch_linear_init(kp, 256, 256)
    wp, bp = prepare_params(w, b)
    out = jax.block_until_ready(
        linear_residual(x, wp, bp, force_tiled=True, tile_k=128, tile_n=128))
    check("tiled", out, _np_reference(x, wp, bp), 1e-3, 1e-3)

    print("KERNEL_OK")
</pallas_src>

<mosaic_0001>
module attributes {stable_mosaic.version = 11 : i64} {
  func.func @_resident_kernel(%arg0: i32, %arg1: memref<8x64xf32, #tpu.memory_space<vmem>>, %arg2: memref<64x64xf32, #tpu.memory_space<vmem>>, %arg3: memref<1x64xf32, #tpu.memory_space<vmem>>, %arg4: memref<8x64xf32, #tpu.memory_space<vmem>>) attributes {dimension_semantics = [#tpu.dimension_semantics<parallel>], iteration_bounds = array<i64: 1>, scalar_prefetch = 0 : i64, scratch_operands = 0 : i64, tpu.core_type = #tpu.core_type<tc>, window_params = [{transform_indices = @transform_0, window_bounds = array<i64: 8, 64>}, {pipeline_mode = #tpu.pipeline_mode<synchronous>, transform_indices = @transform_1, window_bounds = array<i64: 64, 64>}, {pipeline_mode = #tpu.pipeline_mode<synchronous>, transform_indices = @transform_2, window_bounds = array<i64: 1, 64>}, {transform_indices = @transform_3, window_bounds = array<i64: 8, 64>}]} {
    %c0 = arith.constant 0 : index
    %c0_0 = arith.constant 0 : index
    %0 = vector.load %arg1[%c0, %c0_0] : memref<8x64xf32, #tpu.memory_space<vmem>>, vector<8x64xf32>
    %c0_1 = arith.constant 0 : index
    %c0_2 = arith.constant 0 : index
    %1 = vector.load %arg2[%c0_1, %c0_2] : memref<64x64xf32, #tpu.memory_space<vmem>>, vector<64x64xf32>
    %cst = arith.constant dense<0.000000e+00> : vector<8x64xf32>
    %2 = tpu.matmul %0, %1, %cst {dimension_numbers = #tpu.dot_dimension_numbers<[1], [0], [0], [1], [0, 0, 1, 1], [], []>} : vector<8x64xf32>, vector<64x64xf32>, vector<8x64xf32> -> vector<8x64xf32>
    %c0_3 = arith.constant 0 : index
    %c0_4 = arith.constant 0 : index
    %3 = vector.load %arg3[%c0_3, %c0_4] : memref<1x64xf32, #tpu.memory_space<vmem>>, vector<1x64xf32>
    %4 = vector.broadcast %3 : vector<1x64xf32> to vector<8x64xf32>
    %5 = arith.addf %2, %4 : vector<8x64xf32>
    %6 = arith.addf %5, %0 : vector<8x64xf32>
    %c0_5 = arith.constant 0 : index
    %c0_6 = arith.constant 0 : index
    %7 = vector.load %arg4[%c0_5, %c0_6] : memref<8x64xf32, #tpu.memory_space<vmem>>, vector<8x64xf32>
    tpu.vector_store %arg4[%c0_5, %c0_6], %6 {strides = array<i32>} : memref<8x64xf32, #tpu.memory_space<vmem>>, vector<8x64xf32>,
    return
  }
  func.func @transform_0(%arg0: i32) -> (i32, i32) {
    %c0_i32 = arith.constant 0 : i32
    %c0_i32_0 = arith.constant 0 : i32
    return %arg0, %c0_i32 : i32, i32
  }
  func.func @transform_1(%arg0: i32) -> (i32, i32) {
    %c0_i32 = arith.constant 0 : i32
    %c0_i32_0 = arith.constant 0 : i32
    %c0_i32_1 = arith.constant 0 : i32
    return %c0_i32, %c0_i32_0 : i32, i32
  }
  func.func @transform_2(%arg0: i32) -> (i32, i32) {
    %c0_i32 = arith.constant 0 : i32
    %c0_i32_0 = arith.constant 0 : i32
    %c0_i32_1 = arith.constant 0 : i32
    return %c0_i32, %c0_i32_0 : i32, i32
  }
  func.func @transform_3(%arg0: i32) -> (i32, i32) {
    %c0_i32 = arith.constant 0 : i32
    %c0_i32_0 = arith.constant 0 : i32
    return %arg0, %c0_i32 : i32, i32
  }
}

module attributes {stable_mosaic.version = 11 : i64} {
  func.func @_resident_kernel(%arg0: i32, %arg1: memref<8x64xf32, #tpu.memory_space<vmem>>, %arg2: memref<64x64xf32, #tpu.memory_space<vmem>>, %arg3: memref<1x64xf32, #tpu.memory_space<vmem>>, %arg4: memref<8x64xf32, #tpu.memory_space<vmem>>) attributes {dimension_semantics = [#tpu.dimension_semantics<parallel>], iteration_bounds = array<i64: 1>, scalar_prefetch = 0 : i64, scratch_operands = 0 : i64, tpu.core_type = #tpu.core_type<tc>, window_params = [{transform_indices = @transform_0, window_bounds = array<i64: 8, 64>}, {pipeline_mode = #tpu.pipeline_mode<synchronous>, transform_indices = @transform_1, window_bounds = array<i64: 64, 64>}, {pipeline_mode = #tpu.pipeline_mode<synchronous>, transform_indices = @transform_2, window_bounds = array<i64: 1, 64>}, {transform_indices = @transform_3, window_bounds = array<i64: 8, 64>}]} {
    %c0 = arith.constant 0 : index
    %c0_0 = arith.constant 0 : index
    %0 = vector.load %arg1[%c0, %c0_0] : memref<8x64xf32, #tpu.memory_space<vmem>>, vector<8x64xf32>
    %c0_1 = arith.constant 0 : index
    %c0_2 = arith.constant 0 : index
    %1 = vector.load %arg2[%c0_1, %c0_2] : memref<64x64xf32, #tpu.memory_space<vmem>>, vector<64x64xf32>
    %cst = arith.constant dense<0.000000e+00> : vector<8x64xf32>
    %2 = tpu.matmul %0, %1, %cst {dimension_numbers = #tpu.dot_dimension_numbers<[1], [0], [0], [1], [0, 0, 1, 1], [], []>} : vector<8x64xf32>, vector<64x64xf32>, vector<8x64xf32> -> vector<8x64xf32>
    %c0_3 = arith.constant 0 : index
    %c0_4 = arith.constant 0 : index
    %3 = vector.load %arg3[%c0_3, %c0_4] : memref<1x64xf32, #tpu.memory_space<vmem>>, vector<1x64xf32>
    %4 = vector.broadcast %3 : vector<1x64xf32> to vector<8x64xf32>
    %5 = arith.addf %2, %4 : vector<8x64xf32>
    %6 = arith.addf %5, %0 : vector<8x64xf32>
    %c0_5 = arith.constant 0 : index
    %c0_6 = arith.constant 0 : index
    %7 = vector.load %arg4[%c0_5, %c0_6] : memref<8x64xf32, #tpu.memory_space<vmem>>, vector<8x64xf32>
    tpu.vector_store %arg4[%c0_5, %c0_6], %6 {strides = array<i32>} : memref<8x64xf32, #tpu.memory_space<vmem>>, vector<8x64xf32>,
    return
  }
  func.func @transform_0(%arg0: i32) -> (i32, i32) {
    %c0_i32 = arith.constant 0 : i32
    %c0_i32_0 = arith.constant 0 : i32
    return %arg0, %c0_i32 : i32, i32
  }
  func.func @transform_1(%arg0: i32) -> (i32, i32) {
    %c0_i32 = arith.constant 0 : i32
    %c0_i32_0 = arith.constant 0 : i32
    %c0_i32_1 = arith.constant 0 : i32
    return %c0_i32, %c0_i32_0 : i32, i32
  }
  func.func @transform_2(%arg0: i32) -> (i32, i32) {
    %c0_i32 = arith.constant 0 : i32
    %c0_i32_0 = arith.constant 0 : i32
    %c0_i32_1 = arith.constant 0 : i32
    return %c0_i32, %c0_i32_0 : i32, i32
  }
  func.func @transform_3(%arg0: i32) -> (i32, i32) {
    %c0_i32 = arith.constant 0 : i32
    %c0_i32_0 = arith.constant 0 : i32
    return %arg0, %c0_i32 : i32, i32
  }
}

</mosaic_0001>

<llo_original>
// kernel: tpu_custom_call.1
$region0: #{tpu_custom_call.1}
  #allocation0 [shape = 'u32[]', space=smem, size = 0x4, offset = 0x4, fixed_abs, tag = 'smem constant byte address 0x4 - core index']
  #allocation1 [shape = 'u32[144,128]{1,0:T(1,128)}', space=vmem, size = 0x12000, scoped, tag = 'internal scratch']
  %s0 = inlined_call_operand.hbm [shape: f32[8,64], index: 0, kind: input, shape index: {}]
  %s1 = inlined_call_operand.hbm [shape: f32[64,64], index: 1, kind: input, shape index: {}]
  %s2 = inlined_call_operand.vmem [shape: f32[1,64], index: 2, kind: input, shape index: {}]
  %s3 = inlined_call_operand.hbm [shape: f32[8,64], index: 3, kind: output, shape index: {}]
  %s4 = sld [smem:[#allocation0]]
  $region30: #{tpu_custom_call.1} parent=0
    _
  %s6 = ssub.s32 1, %s4
  %s7 = scalar_select 0, %s6, %s4
  $region1: #{tpu_custom_call.1} parent=0
    #allocation2 [shape = 'u8[4096]{0}', space=vmem, size = 0x1000, scoped, tag = 'input window, operand 0, single buffered']
    #allocation3 [shape = 's32[1]{0}', space=sflag, size = 0x4, scoped, tag = 'scoped memory for tpu_custom_call.1']
    #allocation4 [shape = 's32[1]{0}', space=sflag, size = 0x4, scoped, tag = 'scoped memory for tpu_custom_call.1']
    #allocation5 [shape = 'u8[32768]{0}', space=vmem, size = 0x8000, scoped, tag = 'input window, operand 1, single buffered']
    #allocation6 [shape = 's32[1]{0}', space=sflag, size = 0x4, scoped, tag = 'scoped memory for tpu_custom_call.1']
    #allocation7 [shape = 'u8[4096]{0}', space=vmem, size = 0x1000, scoped, tag = 'output window, operand 0, single buffered']
    %8 = vsyncpa [#allocation3], 0
    %9 = vsyncpa [#allocation6], 0
    %10 = vsyncpa [#allocation4], 0
    // Predicated region
    $region2: #{tpu_custom_call.1} parent=1 // pred_check
      _
    $region3: #{tpu_custom_call.1} parent=1 // pred_check_branch
      %12 = sbr.rel (0) target = $region5
    $region4: #{tpu_custom_call.1} parent=1 // pred_region
      %s14 = ssub.s32 128, 128
      %15 = vsyncadd [#allocation3], %s14
      %s17 = sshll.u32 [#allocation2], 4
      %s18 = int_to_ptr.vmem [resolvable:$true] %s17
      %20 = dma.hbm_to_vmem [thread:$0]  %s0, 128, %s18, [#allocation3]
    $region5: #{tpu_custom_call.1} parent=1 // pred_fallthru
      _
    // Predicated region
    $region6: #{tpu_custom_call.1} parent=1 // pred_check
      _
    $region7: #{tpu_custom_call.1} parent=1 // pred_check_branch
      %22 = sbr.rel (0) target = $region9
    $region8: #{tpu_custom_call.1} parent=1 // pred_region
      %s24 = ssub.s32 1024, 1024
      %25 = vsyncadd [#allocation6], %s24
      %s26 = sshll.u32 [#allocation5], 4
      %s27 = int_to_ptr.vmem [resolvable:$true] %s26
      %32 = dma.hbm_to_vmem [thread:$0]  %s1, 1024, %s27, [#allocation6], 128, 128, 8
    $region9: #{tpu_custom_call.1} parent=1 // pred_fallthru
      _
    // Predicated region
    $region10: #{tpu_custom_call.1} parent=1 // pred_check
      _
    $region11: #{tpu_custom_call.1} parent=1 // pred_check_branch
      %34 = sbr.rel (0) target = $region13
    $region12: #{tpu_custom_call.1} parent=1 // pred_region
      _
    $region13: #{tpu_custom_call.1} parent=1 // pred_fallthru
      _
    // Predicated region
    $region14: #{tpu_custom_call.1} parent=1 // pred_check
      _
    $region15: #{tpu_custom_call.1} parent=1 // pred_check_branch
      %36 = sbr.rel (0) target = $region17
    $region16: #{tpu_custom_call.1} parent=1 // pred_region
      %37 = dma.done [#allocation3], 128
    $region17: #{tpu_custom_call.1} parent=1 // pred_fallthru
      _
    // Predicated region
    $region18: #{tpu_custom_call.1} parent=1 // pred_check
      _
    $region19: #{tpu_custom_call.1} parent=1 // pred_check_branch
      %39 = sbr.rel (0) target = $region21
    $region20: #{tpu_custom_call.1} parent=1 // pred_region
      %40 = dma.done [#allocation6], 1024
    $region21: #{tpu_custom_call.1} parent=1 // pred_fallthru
      _
    %v41 = vld [vmem:[#allocation2] sm:$0xff]
    %v42 = vld [vmem:[#allocation5] sm:$0xff]
    %v43 = vld [vmem:[#allocation5 + $0x8] sm:$0xff]
    %v44 = vld [vmem:[#allocation5 + $0x10] sm:$0xff]
    %v45 = vld [vmem:[#allocation5 + $0x18] sm:$0xff]
    %v46 = vld [vmem:[#allocation5 + $0x20] sm:$0xff]
    %v47 = vld [vmem:[#allocation5 + $0x28] sm:$0xff]
    %v48 = vld [vmem:[#allocation5 + $0x30] sm:$0xff]
    %v49 = vld [vmem:[#allocation5 + $0x38] sm:$0xff]
    %v50 = vld [vmem:[%s2] sm:$0x1]
    %v52 = vlaneseq
    %v53 = vshrl.u32 %v52, 7
    %v54 = vsub.s32 0, %v53
    %v55 = vrot.slane %v50, %v54
    %vm57 = vcmask 523264
    %v59 = vsel %vm57, %v41, 0
    %61 = vmatprep.subr.mxu0 0.0
    %62 = vmatpush1.msra.mxu0 %v42
    %63 = vmatprep.subr.mxu0 0.0
    %64 = vmatpush1.msra.mxu0 %v43
    %65 = vmatprep.subr.mxu0 0.0
    %66 = vmatpush1.msra.mxu0 %v44
    %67 = vmatprep.subr.mxu0 0.0
    %68 = vmatpush1.msra.mxu0 %v45
    %69 = vmatprep.subr.mxu0 0.0
    %70 = vmatpush1.msra.mxu0 %v46
    %71 = vmatprep.subr.mxu0 0.0
    %72 = vmatpush1.msra.mxu0 %v47
    %73 = vmatprep.subr.mxu0 0.0
    %74 = vmatpush1.msra.mxu0 %v48
    %75 = vmatprep.subr.mxu0 0.0
    %76 = vmatpush1.msra.mxu0 %v49
    %77 = vmatprep.subr.mxu0 0.0
    %78 = vmatpush1.msra.mxu0 0.0
    %79 = vmatprep.subr.mxu0 0.0
    %80 = vmatpush1.msra.mxu0 0.0
    %81 = vmatprep.subr.mxu0 0.0
    %82 = vmatpush1.msra.mxu0 0.0
    %83 = vmatprep.subr.mxu0 0.0
    %84 = vmatpush1.msra.mxu0 0.0
    %85 = vmatprep.subr.mxu0 0.0
    %86 = vmatpush1.msra.mxu0 0.0
    %87 = vmatprep.subr.mxu0 0.0
    %88 = vmatpush1.msra.mxu0 0.0
    %89 = vmatprep.subr.mxu0 0.0
    %90 = vmatpush1.msra.mxu0 0.0
    %91 = vmatprep.subr.mxu0 0.0
    %92 = vmatpush1.msra.mxu0 0.0
    %93 = vmatprep.subr.mxu0 0.0
    %94 = vmatpush1.msra.mxu0 0.0
    %95 = vmatprep.subr.mxu0 0.0
    %96 = vmatpush1.msra.mxu0 0.0
    %97 = vmatprep.subr.mxu0 0.0
    %98 = vmatpush1.msra.mxu0 0.0
    %99 = vmatprep.subr.mxu0 0.0
    %100 = vmatpush1.msra.mxu0 0.0
    %101 = vmatprep.subr.mxu0 0.0
    %102 = vmatpush1.msra.mxu0 0.0
    %103 = vmatprep.subr.mxu0 0.0
    %104 = vmatpush1.msra.mxu0 0.0
    %105 = vmatprep.subr.mxu0 0.0
    %106 = vmatpush1.msra.mxu0 0.0
    %107 = vmatprep.subr.mxu0 0.0
    %108 = vmatpush1.msra.mxu0 0.0
    %109 = vmatprep.subr.mxu0 0.0
    %110 = vmatpush1.msra.mxu0 0.0
    %111 = vmatprep.subr.mxu0 0.0
    %112 = vmatpush1.msra.mxu0 0.0
    %113 = vmatprep.subr.mxu0 0.0
    %114 = vmatpush1.msra.mxu0 0.0
    %115 = vmatprep.subr.mxu0 0.0
    %116 = vmatpush1.msra.mxu0 0.0
    %117 = vmatprep.subr.mxu0 0.0
    %118 = vmatpush1.msra.mxu0 0.0
    %119 = vmatprep.subr.mxu0 0.0
    %120 = vmatpush1.msra.mxu0 0.0
    %121 = vmatprep.subr.mxu0 0.0
    %122 = vmatpush1.msra.mxu0 0.0
    %123 = vmatprep.subr.mxu0 0.0
    %124 = vmatpush1.msra.mxu0 0.0
    %125 = vmatprep.mubr.f32.mxu0 0.0
    %126 = vmatmul.mubr.f32.gmra.mrb[0].mxu0 %v59
    %v127 = vpop.f32.mrb[0].mxu0
    %v128 = vadd.f32 %v55, %v127
    %v129 = vpop.f32.mrb[0].mxu0
    %130 = vdwg.mxu0
    %v131 = vadd.f32 %v128, %v41
    %132 = vst.msk [vmem:[#allocation7] sm:$0xff] %vm57, %v131
    // Predicated region
    $region22: #{tpu_custom_call.1} parent=1 // pred_check
      _
    $region23: #{tpu_custom_call.1} parent=1 // pred_check_branch
      %134 = sbr.rel (0) target = $region25
    $region24: #{tpu_custom_call.1} parent=1 // pred_region
      %s136 = ssub.s32 128, 128
      %137 = vsyncadd [#allocation4], %s136
      %s139 = sshll.u32 [#allocation7], 4
      %s140 = int_to_ptr.vmem [resolvable:$true] %s139
      %142 = dma.vmem_to_hbm [thread:$0]  %s140, 128, %s3, [#allocation4]
    $region25: #{tpu_custom_call.1} parent=1 // pred_fallthru
      _
    // Predicated region
    $region26: #{tpu_custom_call.1} parent=1 // pred_check
      _
    $region27: #{tpu_custom_call.1} parent=1 // pred_check_branch
      %144 = sbr.rel (0) target = $region29
    $region28: #{tpu_custom_call.1} parent=1 // pred_region
      %145 = dma.done [#allocation4], 128
    $region29: #{tpu_custom_call.1} parent=1 // pred_fallthru
      _
    %146 = vsyncpa [#allocation3], 1
    %147 = vsyncpa [#allocation6], 1
    %148 = vsyncpa [#allocation4], 1

// kernel: tpu_custom_call.1
$region0: #{tpu_custom_call.1}
  #allocation0 [shape = 'u32[]', space=smem, size = 0x4, offset = 0x4, fixed_abs, tag = 'smem constant byte address 0x4 - core index']
  #allocation1 [shape = 'u32[144,128]{1,0:T(1,128)}', space=vmem, size = 0x12000, scoped, tag = 'internal scratch']
  %s0 = inlined_call_operand.hbm [shape: f32[8,64], index: 0, kind: input, shape index: {}]
  %s1 = inlined_call_operand.hbm [shape: f32[64,64], index: 1, kind: input, shape index: {}]
  %s2 = inlined_call_operand.vmem [shape: f32[1,64], index: 2, kind: input, shape index: {}]
  %s3 = inlined_call_operand.hbm [shape: f32[8,64], index: 3, kind: output, shape index: {}]
  %s4 = sld [smem:[#allocation0]]
  $region30: #{tpu_custom_call.1} parent=0
    _
  %s6 = ssub.s32 1, %s4
  %s7 = scalar_select 0, %s6, %s4
  $region1: #{tpu_custom_call.1} parent=0
    #allocation2 [shape = 'u8[4096]{0}', space=vmem, size = 0x1000, scoped, tag = 'input window, operand 0, single buffered']
    #allocation3 [shape = 's32[1]{0}', space=sflag, size = 0x4, scoped, tag = 'scoped memory for tpu_custom_call.1']
    #allocation4 [shape = 's32[1]{0}', space=sflag, size = 0x4, scoped, tag = 'scoped memory for tpu_custom_call.1']
    #allocation5 [shape = 'u8[32768]{0}', space=vmem, size = 0x8000, scoped, tag = 'input window, operand 1, single buffered']
    #allocation6 [shape = 's32[1]{0}', space=sflag, size = 0x4, scoped, tag = 'scoped memory for tpu_custom_call.1']
    #allocation7 [shape = 'u8[4096]{0}', space=vmem, size = 0x1000, scoped, tag = 'output window, operand 0, single buffered']
    %8 = vsyncpa [#allocation3], 0
    %9 = vsyncpa [#allocation6], 0
    %10 = vsyncpa [#allocation4], 0
    // Predicated region
    $region2: #{tpu_custom_call.1} parent=1 // pred_check
      _
    $region3: #{tpu_custom_call.1} parent=1 // pred_check_branch
      %12 = sbr.rel (0) target = $region5
    $region4: #{tpu_custom_call.1} parent=1 // pred_region
      %s14 = ssub.s32 128, 128
      %15 = vsyncadd [#allocation3], %s14
      %s17 = sshll.u32 [#allocation2], 4
      %s18 = int_to_ptr.vmem [resolvable:$true] %s17
      %20 = dma.hbm_to_vmem [thread:$0]  %s0, 128, %s18, [#allocation3]
    $region5: #{tpu_custom_call.1} parent=1 // pred_fallthru
      _
    // Predicated region
    $region6: #{tpu_custom_call.1} parent=1 // pred_check
      _
    $region7: #{tpu_custom_call.1} parent=1 // pred_check_branch
      %22 = sbr.rel (0) target = $region9
    $region8: #{tpu_custom_call.1} parent=1 // pred_region
      %s24 = ssub.s32 1024, 1024
      %25 = vsyncadd [#allocation6], %s24
      %s26 = sshll.u32 [#allocation5], 4
      %s27 = int_to_ptr.vmem [resolvable:$true] %s26
      %32 = dma.hbm_to_vmem [thread:$0]  %s1, 1024, %s27, [#allocation6], 128, 128, 8
    $region9: #{tpu_custom_call.1} parent=1 // pred_fallthru
      _
    // Predicated region
    $region10: #{tpu_custom_call.1} parent=1 // pred_check
      _
    $region11: #{tpu_custom_call.1} parent=1 // pred_check_branch
      %34 = sbr.rel (0) target = $region13
    $region12: #{tpu_custom_call.1} parent=1 // pred_region
      _
    $region13: #{tpu_custom_call.1} parent=1 // pred_fallthru
      _
    // Predicated region
    $region14: #{tpu_custom_call.1} parent=1 // pred_check
      _
    $region15: #{tpu_custom_call.1} parent=1 // pred_check_branch
      %36 = sbr.rel (0) target = $region17
    $region16: #{tpu_custom_call.1} parent=1 // pred_region
      %37 = dma.done [#allocation3], 128
    $region17: #{tpu_custom_call.1} parent=1 // pred_fallthru
      _
    // Predicated region
    $region18: #{tpu_custom_call.1} parent=1 // pred_check
      _
    $region19: #{tpu_custom_call.1} parent=1 // pred_check_branch
      %39 = sbr.rel (0) target = $region21
    $region20: #{tpu_custom_call.1} parent=1 // pred_region
      %40 = dma.done [#allocation6], 1024
    $region21: #{tpu_custom_call.1} parent=1 // pred_fallthru
      _
    %v41 = vld [vmem:[#allocation2] sm:$0xff]
    %v42 = vld [vmem:[#allocation5] sm:$0xff]
    %v43 = vld [vmem:[#allocation5 + $0x8] sm:$0xff]
    %v44 = vld [vmem:[#allocation5 + $0x10] sm:$0xff]
    %v45 = vld [vmem:[#allocation5 + $0x18] sm:$0xff]
    %v46 = vld [vmem:[#allocation5 + $0x20] sm:$0xff]
    %v47 = vld [vmem:[#allocation5 + $0x28] sm:$0xff]
    %v48 = vld [vmem:[#allocation5 + $0x30] sm:$0xff]
    %v49 = vld [vmem:[#allocation5 + $0x38] sm:$0xff]
    %v50 = vld [vmem:[%s2] sm:$0x1]
    %v52 = vlaneseq
    %v53 = vshrl.u32 %v52, 7
    %v54 = vsub.s32 0, %v53
    %v55 = vrot.slane %v50, %v54
    %vm57 = vcmask 523264
    %v59 = vsel %vm57, %v41, 0
    %61 = vmatprep.subr.mxu0 0.0
    %62 = vmatpush1.msra.mxu0 %v42
    %63 = vmatprep.subr.mxu0 0.0
    %64 = vmatpush1.msra.mxu0 %v43
    %65 = vmatprep.subr.mxu0 0.0
    %66 = vmatpush1.msra.mxu0 %v44
    %67 = vmatprep.subr.mxu0 0.0
    %68 = vmatpush1.msra.mxu0 %v45
    %69 = vmatprep.subr.mxu0 0.0
    %70 = vmatpush1.msra.mxu0 %v46
    %71 = vmatprep.subr.mxu0 0.0
    %72 = vmatpush1.msra.mxu0 %v47
    %73 = vmatprep.subr.mxu0 0.0
    %74 = vmatpush1.msra.mxu0 %v48
    %75 = vmatprep.subr.mxu0 0.0
    %76 = vmatpush1.msra.mxu0 %v49
    %77 = vmatprep.subr.mxu0 0.0
    %78 = vmatpush1.msra.mxu0 0.0
    %79 = vmatprep.subr.mxu0 0.0
    %80 = vmatpush1.msra.mxu0 0.0
    %81 = vmatprep.subr.mxu0 0.0
    %82 = vmatpush1.msra.mxu0 0.0
    %83 = vmatprep.subr.mxu0 0.0
    %84 = vmatpush1.msra.mxu0 0.0
    %85 = vmatprep.subr.mxu0 0.0
    %86 = vmatpush1.msra.mxu0 0.0
    %87 = vmatprep.subr.mxu0 0.0
    %88 = vmatpush1.msra.mxu0 0.0
    %89 = vmatprep.subr.mxu0 0.0
    %90 = vmatpush1.msra.mxu0 0.0
    %91 = vmatprep.subr.mxu0 0.0
    %92 = vmatpush1.msra.mxu0 0.0
    %93 = vmatprep.subr.mxu0 0.0
    %94 = vmatpush1.msra.mxu0 0.0
    %95 = vmatprep.subr.mxu0 0.0
    %96 = vmatpush1.msra.mxu0 0.0
    %97 = vmatprep.subr.mxu0 0.0
    %98 = vmatpush1.msra.mxu0 0.0
    %99 = vmatprep.subr.mxu0 0.0
    %100 = vmatpush1.msra.mxu0 0.0
    %101 = vmatprep.subr.mxu0 0.0
    %102 = vmatpush1.msra.mxu0 0.0
    %103 = vmatprep.subr.mxu0 0.0
    %104 = vmatpush1.msra.mxu0 0.0
    %105 = vmatprep.subr.mxu0 0.0
    %106 = vmatpush1.msra.mxu0 0.0
    %107 = vmatprep.subr.mxu0 0.0
    %108 = vmatpush1.msra.mxu0 0.0
    %109 = vmatprep.subr.mxu0 0.0
    %110 = vmatpush1.msra.mxu0 0.0
    %111 = vmatprep.subr.mxu0 0.0
    %112 = vmatpush1.msra.mxu0 0.0
    %113 = vmatprep.subr.mxu0 0.0
    %114 = vmatpush1.msra.mxu0 0.0
    %115 = vmatprep.subr.mxu0 0.0
    %116 = vmatpush1.msra.mxu0 0.0
    %117 = vmatprep.subr.mxu0 0.0
    %118 = vmatpush1.msra.mxu0 0.0
    %119 = vmatprep.subr.mxu0 0.0
    %120 = vmatpush1.msra.mxu0 0.0
    %121 = vmatprep.subr.mxu0 0.0
    %122 = vmatpush1.msra.mxu0 0.0
    %123 = vmatprep.subr.mxu0 0.0
    %124 = vmatpush1.msra.mxu0 0.0
    %125 = vmatprep.mubr.f32.mxu0 0.0
    %126 = vmatmul.mubr.f32.gmra.mrb[0].mxu0 %v59
    %v127 = vpop.f32.mrb[0].mxu0
    %v128 = vadd.f32 %v55, %v127
    %v129 = vpop.f32.mrb[0].mxu0
    %130 = vdwg.mxu0
    %v131 = vadd.f32 %v128, %v41
    %132 = vst.msk [vmem:[#allocation7] sm:$0xff] %vm57, %v131
    // Predicated region
    $region22: #{tpu_custom_call.1} parent=1 // pred_check
      _
    $region23: #{tpu_custom_call.1} parent=1 // pred_check_branch
      %134 = sbr.rel (0) target = $region25
    $region24: #{tpu_custom_call.1} parent=1 // pred_region
      %s136 = ssub.s32 128, 128
      %137 = vsyncadd [#allocation4], %s136
      %s139 = sshll.u32 [#allocation7], 4
      %s140 = int_to_ptr.vmem [resolvable:$true] %s139
      %142 = dma.vmem_to_hbm [thread:$0]  %s140, 128, %s3, [#allocation4]
    $region25: #{tpu_custom_call.1} parent=1 // pred_fallthru
      _
    // Predicated region
    $region26: #{tpu_custom_call.1} parent=1 // pred_check
      _
    $region27: #{tpu_custom_call.1} parent=1 // pred_check_branch
      %144 = sbr.rel (0) target = $region29
    $region28: #{tpu_custom_call.1} parent=1 // pred_region
      %145 = dma.done [#allocation4], 128
    $region29: #{tpu_custom_call.1} parent=1 // pred_fallthru
      _
    %146 = vsyncpa [#allocation3], 1
    %147 = vsyncpa [#allocation6], 1
    %148 = vsyncpa [#allocation4], 1

</llo_original>
